<compile_context>
chip_gen: v7x
topology: tpu7x:2x2x1
jax: 0.10.0
libtpu: 0.0.40
codegen_flags: <defaults>
</compile_context>

<pallas_src>
import functools

import jax
import jax.numpy as jnp
from jax.experimental import pallas as pl
from jax.experimental.pallas import tpu as pltpu


# ---------------------------------------------------------------------------
# Fused kernel: conv1+bn1+relu -> conv2(3x3, im2col matmul)+bn2+relu
#               -> conv3+bn3+residual+relu
# ---------------------------------------------------------------------------

def _bottleneck_kernel(x_ref, w1_ref, b1_ref, w2_ref, b2_ref, w3_ref, b3_ref,
                       mask_ref, o_ref, p_ref, *, H, W, compute_dtype):
    """One grid step == one image, channel-major (C, H*W) layout.

    x_ref    : (1, Cin, HW)    input rows (also the residual)
    w1_ref   : (Cmid, Cin)     conv1 weight, BN1 scale folded (compute dtype)
    b1_ref   : (Cmid, 1)       BN1 bias (f32)
    w2_ref   : (Cmid, 9*Cmid)  conv2 weight, tap-major K, BN2 folded
    b2_ref   : (Cmid, 1)       BN2 bias (f32)
    w3_ref   : (Cout, Cmid)    conv3 weight, BN3 folded
    b3_ref   : (Cout, 1)       BN3 bias (f32)
    mask_ref : (9, HW)         {0,1} border masks per 3x3 tap (compute dtype)
    o_ref    : (1, Cout, HW)   output
    p_ref    : (9*Cmid, HW)    VMEM im2col patch buffer (compute dtype)
    """
    HW = H * W
    c_mid = w1_ref.shape[0]

    x2d = x_ref[0]                                            # (Cin, HW), one DMA

    # ---- conv1 (1x1) + bn1 + relu  (MXU, f32 accumulation) ------------------
    h1 = jnp.dot(w1_ref[...], x2d.astype(compute_dtype),
                 preferred_element_type=jnp.float32)          # (Cmid, HW)
    h1c = jnp.maximum(h1 + b1_ref[...], 0.0).astype(compute_dtype)

    # ---- build im2col patch buffer for the 3x3 conv (never leaves VMEM) -----
    # Tap (di,dj) needs shifted[:, i*W+j] = h1[:, (i+di-1)*W + (j+dj-1)], with zero
    # outside the image.  A lane roll by ((1-di)*W + (1-dj)) mod HW realizes the shift
    # (no wraparound lands on a kept position); the border positions are zeroed with a
    # precomputed (1, HW) {0,1} mask (host-built, so no in-kernel div/mod).
    for k in range(9):                                        # static unroll, 9 taps
        di, dj = divmod(k, 3)
        shift = ((1 - di) * W + (1 - dj)) % HW
        tap = h1c if shift == 0 else pltpu.roll(h1c, shift=shift, axis=1)
        if k != 4:                                            # center tap needs no mask
            tap = tap * mask_ref[pl.ds(k, 1), :]              # broadcast over channels
        p_ref[pl.ds(k * c_mid, c_mid), :] = tap               # aligned sublane segment

    # ---- conv2 (3x3) as ONE matmul with K = 9*Cmid + bn2 + relu -------------
    h2 = jnp.dot(w2_ref[...], p_ref[...],
                 preferred_element_type=jnp.float32)          # (Cmid, HW)
    h2 = jnp.maximum(h2 + b2_ref[...], 0.0)

    # ---- conv3 (1x1) + bn3 + residual add + relu ----------------------------
    out = jnp.dot(w3_ref[...], h2.astype(compute_dtype),
                  preferred_element_type=jnp.float32)         # (Cout, HW)
    out = out + b3_ref[...] + x2d.astype(jnp.float32)         # reuse resident x tile
    o_ref[0] = jnp.maximum(out, 0.0).astype(o_ref.dtype)


# ---------------------------------------------------------------------------
# Host-side glue: BN folding, weight / mask prep, VMEM budget, pallas_call
# ---------------------------------------------------------------------------

def _fold_bn(gamma, beta, running_mean, running_var, eps=1e-5):
    scale = gamma / jnp.sqrt(running_var + eps)
    bias = beta - running_mean * scale
    return scale, bias


def _tap_masks(h, w, dtype):
    """(9, H*W) {0,1} masks: zero-padding of the 3x3 conv at the image border."""
    ii, jj = jnp.meshgrid(jnp.arange(h), jnp.arange(w), indexing="ij")
    rows = []
    for k in range(9):
        di, dj = divmod(k, 3)
        valid = jnp.ones((h, w), jnp.bool_)
        if di == 0:
            valid = valid & (ii >= 1)
        if di == 2:
            valid = valid & (ii <= h - 2)
        if dj == 0:
            valid = valid & (jj >= 1)
        if dj == 2:
            valid = valid & (jj <= w - 2)
        rows.append(valid.reshape(h * w))
    return jnp.stack(rows).astype(dtype)


def bottleneck_forward(x_nchw, params, *, compute_dtype=jnp.bfloat16,
                       out_dtype=None):
    """Forward of the Bottleneck module.  Input is NCHW; output is NCHW out_dtype
    (defaults to the input dtype; pass jnp.bfloat16 when chaining blocks)."""
    n, c_in, h, w = x_nchw.shape
    c_mid = params["w1"].shape[0]
    c_out = params["w3"].shape[0]
    assert c_out == c_in, "downsample=None requires Cout == Cin for the residual"
    hw = h * w
    out_dtype = x_nchw.dtype if out_dtype is None else out_dtype

    # Channel-major rows: just a reshape of NCHW (no transpose at the boundary).
    x_rows = x_nchw.reshape(n, c_in, hw)

    # Fold BN running stats into the conv weights (host-side constant fold).
    s1, bb1 = _fold_bn(params["bn1_gamma"], params["bn1_beta"],
                       params["bn1_mean"], params["bn1_var"])
    s2, bb2 = _fold_bn(params["bn2_gamma"], params["bn2_beta"],
                       params["bn2_mean"], params["bn2_var"])
    s3, bb3 = _fold_bn(params["bn3_gamma"], params["bn3_beta"],
                       params["bn3_mean"], params["bn3_var"])

    # PyTorch conv weights (Cout, Cin, kh, kw) -> channel-major matmul layouts.
    w1f = (params["w1"][:, :, 0, 0] * s1[:, None]).astype(compute_dtype)   # (Cmid, Cin)
    w2f = (jnp.transpose(params["w2"], (0, 2, 3, 1)).reshape(c_mid, 9 * c_mid)
           * s2[:, None]).astype(compute_dtype)                            # (Cmid, 9*Cmid)
    w3f = (params["w3"][:, :, 0, 0] * s3[:, None]).astype(compute_dtype)   # (Cout, Cmid)

    bb1 = bb1.reshape(c_mid, 1).astype(jnp.float32)
    bb2 = bb2.reshape(c_mid, 1).astype(jnp.float32)
    bb3 = bb3.reshape(c_out, 1).astype(jnp.float32)

    masks = _tap_masks(h, w, compute_dtype)                                 # (9, HW)

    kernel = functools.partial(_bottleneck_kernel, H=h, W=w,
                               compute_dtype=compute_dtype)

    # Explicit scoped-VMEM budget: 2x double-buffered in/out blocks + patch buffer
    # + resident weights/masks + headroom for the f32 intermediates.
    itm = jnp.dtype(compute_dtype).itemsize
    x_bytes = c_in * hw * jnp.dtype(x_rows.dtype).itemsize
    o_bytes = c_out * hw * jnp.dtype(out_dtype).itemsize
    p_bytes = 9 * c_mid * hw * itm
    w_bytes = (w1f.size + w2f.size + w3f.size + masks.size) * itm + (2 * c_mid + c_out) * 4
    live_bytes = 6 * max(c_mid, c_out) * hw * 4
    vmem_limit = int(2 * (x_bytes + o_bytes) + p_bytes + w_bytes + live_bytes + (1 << 20))
    vmem_limit = min(max(vmem_limit, 16 * 1024 * 1024), 110 * 1024 * 1024)

    grid_spec = pltpu.PrefetchScalarGridSpec(
        num_scalar_prefetch=0,
        grid=(n,),
        in_specs=[
            pl.BlockSpec((1, c_in, hw), lambda b: (b, 0, 0)),        # x (also residual)
            pl.BlockSpec((c_mid, c_in), lambda b: (0, 0)),           # w1 (resident)
            pl.BlockSpec((c_mid, 1), lambda b: (0, 0)),              # b1
            pl.BlockSpec((c_mid, 9 * c_mid), lambda b: (0, 0)),      # w2 (resident)
            pl.BlockSpec((c_mid, 1), lambda b: (0, 0)),              # b2
            pl.BlockSpec((c_out, c_mid), lambda b: (0, 0)),          # w3 (resident)
            pl.BlockSpec((c_out, 1), lambda b: (0, 0)),              # b3
            pl.BlockSpec((9, hw), lambda b: (0, 0)),                 # border masks
        ],
        out_specs=pl.BlockSpec((1, c_out, hw), lambda b: (b, 0, 0)),
        scratch_shapes=[pltpu.VMEM((9 * c_mid, hw), compute_dtype)],  # im2col buffer
    )

    out_rows = pl.pallas_call(
        kernel,
        out_shape=jax.ShapeDtypeStruct((n, c_out, hw), out_dtype),
        grid_spec=grid_spec,
        compiler_params=pltpu.CompilerParams(
            dimension_semantics=("parallel",),        # megacore over the batch
            vmem_limit_bytes=vmem_limit),
    )(x_rows, w1f, bb1, w2f, bb2, w3f, bb3, masks)

    return out_rows.reshape(n, c_out, h, w)           # free reshape back to NCHW


# ---------------------------------------------------------------------------
# Deterministic synthetic parameters (PyTorch weight shape conventions)
# ---------------------------------------------------------------------------

def init_bottleneck_params(key, c_in, c_mid):
    ks = jax.random.split(key, 9)
    c_out = c_in  # identity residual requires Cout == Cin
    p = {
        "w1": jax.random.normal(ks[0], (c_mid, c_in, 1, 1), jnp.float32) * 0.1,
        "w2": jax.random.normal(ks[1], (c_mid, c_mid, 3, 3), jnp.float32) * 0.1,
        "w3": jax.random.normal(ks[2], (c_out, c_mid, 1, 1), jnp.float32) * 0.1,
    }
    for i, c in zip((1, 2, 3), (c_mid, c_mid, c_out)):
        p[f"bn{i}_gamma"] = 1.0 + 0.05 * jax.random.normal(ks[2 + i], (c,), jnp.float32)
        p[f"bn{i}_beta"] = 0.05 * jax.random.normal(ks[5 + i], (c,), jnp.float32)
        p[f"bn{i}_mean"] = 0.01 * jnp.arange(c, dtype=jnp.float32)
        p[f"bn{i}_var"] = 1.0 + 0.01 * jnp.arange(c, dtype=jnp.float32)
    return p


# ---------------------------------------------------------------------------
# Pure-JAX reference (sanity check)
# ---------------------------------------------------------------------------

def bottleneck_reference(x_nchw, params):
    def conv(x, w):
        pad = (w.shape[2] // 2, w.shape[3] // 2)
        return jax.lax.conv_general_dilated(
            x, w, window_strides=(1, 1),
            padding=((pad[0], pad[0]), (pad[1], pad[1])),
            dimension_numbers=("NCHW", "OIHW", "NCHW"))

    def bn(x, i):
        s, b = _fold_bn(params[f"bn{i}_gamma"], params[f"bn{i}_beta"],
                        params[f"bn{i}_mean"], params[f"bn{i}_var"])
        return x * s[None, :, None, None] + b[None, :, None, None]

    out = jax.nn.relu(bn(conv(x_nchw, params["w1"]), 1))
    out = jax.nn.relu(bn(conv(out, params["w2"]), 2))
    out = bn(conv(out, params["w3"]), 3)
    return jax.nn.relu(out + x_nchw)


# ---------------------------------------------------------------------------

if __name__ == "__main__":
    key = jax.random.PRNGKey(0)
    k_x, k_p = jax.random.split(key)

    N, C_IN, H, W = 2, 16, 16, 16    # NCHW, Cin == Cout (identity residual)
    C_MID = 8                        # bottleneck "planes"

    x = jax.random.normal(k_x, (N, C_IN, H, W), jnp.float32)
    params = init_bottleneck_params(k_p, C_IN, C_MID)

    ref = jax.block_until_ready(bottleneck_reference(x, params))

    # f32 path: should match the XLA reference tightly.
    out_f32 = jax.block_until_ready(
        bottleneck_forward(x, params, compute_dtype=jnp.float32))
    assert out_f32.shape == (N, C_IN, H, W)
    assert jnp.allclose(out_f32, ref, atol=1e-3, rtol=1e-3), (
        float(jnp.max(jnp.abs(out_f32 - ref))))

    # bf16-MXU path (default): f32 accumulation, looser tolerance vs f32 ref.
    out = jax.block_until_ready(bottleneck_forward(x, params))
    assert out.shape == (N, C_IN, H, W)
    assert jnp.allclose(out, ref, atol=3e-2, rtol=3e-2), (
        float(jnp.max(jnp.abs(out - ref))))

    print("KERNEL_OK")
</pallas_src>

<mosaic_0001>
module attributes {stable_mosaic.version = 11 : i64} {
  func.func @_bottleneck_kernel(%arg0: i32, %arg1: memref<1x16x256xf32, #tpu.memory_space<vmem>>, %arg2: memref<8x16xf32, #tpu.memory_space<vmem>>, %arg3: memref<8x1xf32, #tpu.memory_space<vmem>>, %arg4: memref<8x72xf32, #tpu.memory_space<vmem>>, %arg5: memref<8x1xf32, #tpu.memory_space<vmem>>, %arg6: memref<16x8xf32, #tpu.memory_space<vmem>>, %arg7: memref<16x1xf32, #tpu.memory_space<vmem>>, %arg8: memref<9x256xf32, #tpu.memory_space<vmem>>, %arg9: memref<1x16x256xf32, #tpu.memory_space<vmem>>, %arg10: memref<72x256xf32, #tpu.memory_space<vmem>>) attributes {dimension_semantics = [#tpu.dimension_semantics<parallel>], iteration_bounds = array<i64: 2>, scalar_prefetch = 0 : i64, scratch_operands = 1 : i64, tpu.core_type = #tpu.core_type<tc>, window_params = [{transform_indices = @transform_0, window_bounds = array<i64: 1, 16, 256>}, {pipeline_mode = #tpu.pipeline_mode<synchronous>, transform_indices = @transform_1, window_bounds = array<i64: 8, 16>}, {pipeline_mode = #tpu.pipeline_mode<synchronous>, transform_indices = @transform_2, window_bounds = array<i64: 8, 1>}, {pipeline_mode = #tpu.pipeline_mode<synchronous>, transform_indices = @transform_3, window_bounds = array<i64: 8, 72>}, {pipeline_mode = #tpu.pipeline_mode<synchronous>, transform_indices = @transform_4, window_bounds = array<i64: 8, 1>}, {pipeline_mode = #tpu.pipeline_mode<synchronous>, transform_indices = @transform_5, window_bounds = array<i64: 16, 8>}, {pipeline_mode = #tpu.pipeline_mode<synchronous>, transform_indices = @transform_6, window_bounds = array<i64: 16, 1>}, {pipeline_mode = #tpu.pipeline_mode<synchronous>, transform_indices = @transform_7, window_bounds = array<i64: 9, 256>}, {transform_indices = @transform_8, window_bounds = array<i64: 1, 16, 256>}]} {
    %c0 = arith.constant 0 : index
    %c0_0 = arith.constant 0 : index
    %c0_1 = arith.constant 0 : index
    %0 = vector.load %arg1[%c0, %c0_0, %c0_1] : memref<1x16x256xf32, #tpu.memory_space<vmem>>, vector<1x16x256xf32>
    %1 = vector.shape_cast %0 : vector<1x16x256xf32> to vector<16x256xf32>
    %c0_2 = arith.constant 0 : index
    %c0_3 = arith.constant 0 : index
    %2 = vector.load %arg2[%c0_2, %c0_3] : memref<8x16xf32, #tpu.memory_space<vmem>>, vector<8x16xf32>
    %cst = arith.constant dense<0.000000e+00> : vector<8x256xf32>
    %3 = tpu.matmul %2, %1, %cst {dimension_numbers = #tpu.dot_dimension_numbers<[1], [0], [0], [1], [0, 0, 1, 1], [], []>} : vector<8x16xf32>, vector<16x256xf32>, vector<8x256xf32> -> vector<8x256xf32>
    %c0_4 = arith.constant 0 : index
    %c0_5 = arith.constant 0 : index
    %4 = vector.load %arg3[%c0_4, %c0_5] : memref<8x1xf32, #tpu.memory_space<vmem>>, vector<8x1xf32>
    %5 = vector.broadcast %4 : vector<8x1xf32> to vector<8x256xf32>
    %6 = arith.addf %3, %5 : vector<8x256xf32>
    %cst_6 = arith.constant 0.000000e+00 : f32
    %7 = vector.broadcast %cst_6 : f32 to vector<8x256xf32>
    %8 = arith.maximumf %6, %7 : vector<8x256xf32>
    %c17_i32 = arith.constant 17 : i32
    %9 = tpu.dynamic_rotate %8 by %c17_i32 dim 1 : vector<8x256xf32>, i32 -> vector<8x256xf32>
    %c0_7 = arith.constant 0 : index
    %c0_8 = arith.constant 0 : index
    %10 = vector.load %arg8[%c0_7, %c0_8] : memref<9x256xf32, #tpu.memory_space<vmem>>, vector<1x256xf32>
    %11 = vector.broadcast %10 : vector<1x256xf32> to vector<8x256xf32>
    %12 = arith.mulf %9, %11 : vector<8x256xf32>
    %c0_9 = arith.constant 0 : index
    %c0_10 = arith.constant 0 : index
    %13 = vector.load %arg10[%c0_9, %c0_10] : memref<72x256xf32, #tpu.memory_space<vmem>>, vector<8x256xf32>
    tpu.vector_store %arg10[%c0_9, %c0_10], %12 {strides = array<i32>} : memref<72x256xf32, #tpu.memory_space<vmem>>, vector<8x256xf32>,
    %c16_i32 = arith.constant 16 : i32
    %14 = tpu.dynamic_rotate %8 by %c16_i32 dim 1 : vector<8x256xf32>, i32 -> vector<8x256xf32>
    %c1 = arith.constant 1 : index
    %c0_11 = arith.constant 0 : index
    %15 = vector.load %arg8[%c1, %c0_11] : memref<9x256xf32, #tpu.memory_space<vmem>>, vector<1x256xf32>
    %16 = vector.broadcast %15 : vector<1x256xf32> to vector<8x256xf32>
    %17 = arith.mulf %14, %16 : vector<8x256xf32>
    %c8 = arith.constant 8 : index
    %c0_12 = arith.constant 0 : index
    %18 = vector.load %arg10[%c8, %c0_12] : memref<72x256xf32, #tpu.memory_space<vmem>>, vector<8x256xf32>
    tpu.vector_store %arg10[%c8, %c0_12], %17 {strides = array<i32>} : memref<72x256xf32, #tpu.memory_space<vmem>>, vector<8x256xf32>,
    %c15_i32 = arith.constant 15 : i32
    %19 = tpu.dynamic_rotate %8 by %c15_i32 dim 1 : vector<8x256xf32>, i32 -> vector<8x256xf32>
    %c2 = arith.constant 2 : index
    %c0_13 = arith.constant 0 : index
    %20 = vector.load %arg8[%c2, %c0_13] : memref<9x256xf32, #tpu.memory_space<vmem>>, vector<1x256xf32>
    %21 = vector.broadcast %20 : vector<1x256xf32> to vector<8x256xf32>
    %22 = arith.mulf %19, %21 : vector<8x256xf32>
    %c16 = arith.constant 16 : index
    %c0_14 = arith.constant 0 : index
    %23 = vector.load %arg10[%c16, %c0_14] : memref<72x256xf32, #tpu.memory_space<vmem>>, vector<8x256xf32>
    tpu.vector_store %arg10[%c16, %c0_14], %22 {strides = array<i32>} : memref<72x256xf32, #tpu.memory_space<vmem>>, vector<8x256xf32>,
    %c1_i32 = arith.constant 1 : i32
    %24 = tpu.dynamic_rotate %8 by %c1_i32 dim 1 : vector<8x256xf32>, i32 -> vector<8x256xf32>
    %c3 = arith.constant 3 : index
    %c0_15 = arith.constant 0 : index
    %25 = vector.load %arg8[%c3, %c0_15] : memref<9x256xf32, #tpu.memory_space<vmem>>, vector<1x256xf32>
    %26 = vector.broadcast %25 : vector<1x256xf32> to vector<8x256xf32>
    %27 = arith.mulf %24, %26 : vector<8x256xf32>
    %c24 = arith.constant 24 : index
    %c0_16 = arith.constant 0 : index
    %28 = vector.load %arg10[%c24, %c0_16] : memref<72x256xf32, #tpu.memory_space<vmem>>, vector<8x256xf32>
    tpu.vector_store %arg10[%c24, %c0_16], %27 {strides = array<i32>} : memref<72x256xf32, #tpu.memory_space<vmem>>, vector<8x256xf32>,
    %c32 = arith.constant 32 : index
    %c0_17 = arith.constant 0 : index
    %29 = vector.load %arg10[%c32, %c0_17] : memref<72x256xf32, #tpu.memory_space<vmem>>, vector<8x256xf32>
    tpu.vector_store %arg10[%c32, %c0_17], %8 {strides = array<i32>} : memref<72x256xf32, #tpu.memory_space<vmem>>, vector<8x256xf32>,
    %c255_i32 = arith.constant 255 : i32
    %30 = tpu.dynamic_rotate %8 by %c255_i32 dim 1 : vector<8x256xf32>, i32 -> vector<8x256xf32>
    %c5 = arith.constant 5 : index
    %c0_18 = arith.constant 0 : index
    %31 = vector.load %arg8[%c5, %c0_18] : memref<9x256xf32, #tpu.memory_space<vmem>>, vector<1x256xf32>
    %32 = vector.broadcast %31 : vector<1x256xf32> to vector<8x256xf32>
    %33 = arith.mulf %30, %32 : vector<8x256xf32>
    %c40 = arith.constant 40 : index
    %c0_19 = arith.constant 0 : index
    %34 = vector.load %arg10[%c40, %c0_19] : memref<72x256xf32, #tpu.memory_space<vmem>>, vector<8x256xf32>
    tpu.vector_store %arg10[%c40, %c0_19], %33 {strides = array<i32>} : memref<72x256xf32, #tpu.memory_space<vmem>>, vector<8x256xf32>,
    %c241_i32 = arith.constant 241 : i32
    %35 = tpu.dynamic_rotate %8 by %c241_i32 dim 1 : vector<8x256xf32>, i32 -> vector<8x256xf32>
    %c6 = arith.constant 6 : index
    %c0_20 = arith.constant 0 : index
    %36 = vector.load %arg8[%c6, %c0_20] : memref<9x256xf32, #tpu.memory_space<vmem>>, vector<1x256xf32>
    %37 = vector.broadcast %36 : vector<1x256xf32> to vector<8x256xf32>
    %38 = arith.mulf %35, %37 : vector<8x256xf32>
    %c48 = arith.constant 48 : index
    %c0_21 = arith.constant 0 : index
    %39 = vector.load %arg10[%c48, %c0_21] : memref<72x256xf32, #tpu.memory_space<vmem>>, vector<8x256xf32>
    tpu.vector_store %arg10[%c48, %c0_21], %38 {strides = array<i32>} : memref<72x256xf32, #tpu.memory_space<vmem>>, vector<8x256xf32>,
    %c240_i32 = arith.constant 240 : i32
    %40 = tpu.dynamic_rotate %8 by %c240_i32 dim 1 : vector<8x256xf32>, i32 -> vector<8x256xf32>
    %c7 = arith.constant 7 : index
    %c0_22 = arith.constant 0 : index
    %41 = vector.load %arg8[%c7, %c0_22] : memref<9x256xf32, #tpu.memory_space<vmem>>, vector<1x256xf32>
    %42 = vector.broadcast %41 : vector<1x256xf32> to vector<8x256xf32>
    %43 = arith.mulf %40, %42 : vector<8x256xf32>
    %c56 = arith.constant 56 : index
    %c0_23 = arith.constant 0 : index
    %44 = vector.load %arg10[%c56, %c0_23] : memref<72x256xf32, #tpu.memory_space<vmem>>, vector<8x256xf32>
    tpu.vector_store %arg10[%c56, %c0_23], %43 {strides = array<i32>} : memref<72x256xf32, #tpu.memory_space<vmem>>, vector<8x256xf32>,
    %c239_i32 = arith.constant 239 : i32
    %45 = tpu.dynamic_rotate %8 by %c239_i32 dim 1 : vector<8x256xf32>, i32 -> vector<8x256xf32>
    %c8_24 = arith.constant 8 : index
    %c0_25 = arith.constant 0 : index
    %46 = vector.load %arg8[%c8_24, %c0_25] : memref<9x256xf32, #tpu.memory_space<vmem>>, vector<1x256xf32>
    %47 = vector.broadcast %46 : vector<1x256xf32> to vector<8x256xf32>
    %48 = arith.mulf %45, %47 : vector<8x256xf32>
    %c64 = arith.constant 64 : index
    %c0_26 = arith.constant 0 : index
    %49 = vector.load %arg10[%c64, %c0_26] : memref<72x256xf32, #tpu.memory_space<vmem>>, vector<8x256xf32>
    tpu.vector_store %arg10[%c64, %c0_26], %48 {strides = array<i32>} : memref<72x256xf32, #tpu.memory_space<vmem>>, vector<8x256xf32>,
    %c0_27 = arith.constant 0 : index
    %c0_28 = arith.constant 0 : index
    %50 = vector.load %arg4[%c0_27, %c0_28] : memref<8x72xf32, #tpu.memory_space<vmem>>, vector<8x72xf32>
    %c0_29 = arith.constant 0 : index
    %c0_30 = arith.constant 0 : index
    %51 = vector.load %arg10[%c0_29, %c0_30] : memref<72x256xf32, #tpu.memory_space<vmem>>, vector<72x256xf32>
    %cst_31 = arith.constant dense<0.000000e+00> : vector<8x256xf32>
    %52 = tpu.matmul %50, %51, %cst_31 {dimension_numbers = #tpu.dot_dimension_numbers<[1], [0], [0], [1], [0, 0, 1, 1], [], []>} : vector<8x72xf32>, vector<72x256xf32>, vector<8x256xf32> -> vector<8x256xf32>
    %c0_32 = arith.constant 0 : index
    %c0_33 = arith.constant 0 : index
    %53 = vector.load %arg5[%c0_32, %c0_33] : memref<8x1xf32, #tpu.memory_space<vmem>>, vector<8x1xf32>
    %54 = vector.broadcast %53 : vector<8x1xf32> to vector<8x256xf32>
    %55 = arith.addf %52, %54 : vector<8x256xf32>
    %cst_34 = arith.constant 0.000000e+00 : f32
    %56 = vector.broadcast %cst_34 : f32 to vector<8x256xf32>
    %57 = arith.maximumf %55, %56 : vector<8x256xf32>
    %c0_35 = arith.constant 0 : index
    %c0_36 = arith.constant 0 : index
    %58 = vector.load %arg6[%c0_35, %c0_36] : memref<16x8xf32, #tpu.memory_space<vmem>>, vector<16x8xf32>
    %cst_37 = arith.constant dense<0.000000e+00> : vector<16x256xf32>
    %59 = tpu.matmul %58, %57, %cst_37 {dimension_numbers = #tpu.dot_dimension_numbers<[1], [0], [0], [1], [0, 0, 1, 1], [], []>} : vector<16x8xf32>, vector<8x256xf32>, vector<16x256xf32> -> vector<16x256xf32>
    %c0_38 = arith.constant 0 : index
    %c0_39 = arith.constant 0 : index
    %60 = vector.load %arg7[%c0_38, %c0_39] : memref<16x1xf32, #tpu.memory_space<vmem>>, vector<16x1xf32>
    %61 = vector.broadcast %60 : vector<16x1xf32> to vector<16x256xf32>
    %62 = arith.addf %59, %61 : vector<16x256xf32>
    %63 = arith.addf %62, %1 : vector<16x256xf32>
    %cst_40 = arith.constant 0.000000e+00 : f32
    %64 = vector.broadcast %cst_40 : f32 to vector<16x256xf32>
    %65 = arith.maximumf %63, %64 : vector<16x256xf32>
    %c0_41 = arith.constant 0 : index
    %c0_42 = arith.constant 0 : index
    %c0_43 = arith.constant 0 : index
    %66 = vector.load %arg9[%c0_41, %c0_42, %c0_43] : memref<1x16x256xf32, #tpu.memory_space<vmem>>, vector<1x16x256xf32>
    %67 = vector.shape_cast %66 : vector<1x16x256xf32> to vector<16x256xf32>
    %68 = vector.shape_cast %65 : vector<16x256xf32> to vector<1x16x256xf32>
    tpu.vector_store %arg9[%c0_41, %c0_42, %c0_43], %68 {strides = array<i32>} : memref<1x16x256xf32, #tpu.memory_space<vmem>>, vector<1x16x256xf32>,
    return
  }
  func.func @transform_0(%arg0: i32) -> (i32, i32, i32) {
    %c0_i32 = arith.constant 0 : i32
    %c0_i32_0 = arith.constant 0 : i32
    %c0_i32_1 = arith.constant 0 : i32
    return %arg0, %c0_i32, %c0_i32_0 : i32, i32, i32
  }
  func.func @transform_1(%arg0: i32) -> (i32, i32) {
    %c0_i32 = arith.constant 0 : i32
    %c0_i32_0 = arith.constant 0 : i32
    %c0_i32_1 = arith.constant 0 : i32
    return %c0_i32, %c0_i32_0 : i32, i32
  }
  func.func @transform_2(%arg0: i32) -> (i32, i32) {
    %c0_i32 = arith.constant 0 : i32
    %c0_i32_0 = arith.constant 0 : i32
    %c0_i32_1 = arith.constant 0 : i32
    return %c0_i32, %c0_i32_0 : i32, i32
  }
  func.func @transform_3(%arg0: i32) -> (i32, i32) {
    %c0_i32 = arith.constant 0 : i32
    %c0_i32_0 = arith.constant 0 : i32
    %c0_i32_1 = arith.constant 0 : i32
    return %c0_i32, %c0_i32_0 : i32, i32
  }
  func.func @transform_4(%arg0: i32) -> (i32, i32) {
    %c0_i32 = arith.constant 0 : i32
    %c0_i32_0 = arith.constant 0 : i32
    %c0_i32_1 = arith.constant 0 : i32
    return %c0_i32, %c0_i32_0 : i32, i32
  }
  func.func @transform_5(%arg0: i32) -> (i32, i32) {
    %c0_i32 = arith.constant 0 : i32
    %c0_i32_0 = arith.constant 0 : i32
    %c0_i32_1 = arith.constant 0 : i32
    return %c0_i32, %c0_i32_0 : i32, i32
  }
  func.func @transform_6(%arg0: i32) -> (i32, i32) {
    %c0_i32 = arith.constant 0 : i32
    %c0_i32_0 = arith.constant 0 : i32
    %c0_i32_1 = arith.constant 0 : i32
    return %c0_i32, %c0_i32_0 : i32, i32
  }
  func.func @transform_7(%arg0: i32) -> (i32, i32) {
    %c0_i32 = arith.constant 0 : i32
    %c0_i32_0 = arith.constant 0 : i32
    %c0_i32_1 = arith.constant 0 : i32
    return %c0_i32, %c0_i32_0 : i32, i32
  }
  func.func @transform_8(%arg0: i32) -> (i32, i32, i32) {
    %c0_i32 = arith.constant 0 : i32
    %c0_i32_0 = arith.constant 0 : i32
    %c0_i32_1 = arith.constant 0 : i32
    return %arg0, %c0_i32, %c0_i32_0 : i32, i32, i32
  }
}

</mosaic_0001>

<llo_original>
// kernel: tpu_custom_call.1
$region0: #{tpu_custom_call.1}
  #allocation0 [shape = 'u32[]', space=smem, size = 0x4, offset = 0x4, fixed_abs, tag = 'smem constant byte address 0x4 - core index']
  #allocation1 [shape = 'u32[144,128]{1,0:T(1,128)}', space=vmem, size = 0x12000, scoped, tag = 'internal scratch']
  #allocation2 [shape = 'f32[72,256]{1,0:T(8,128)}', space=vmem, size = 0x12000, scoped, tag = 'scratch operand']
  %s0 = inlined_call_operand.hbm [shape: f32[2,16,256], index: 0, kind: input, shape index: {}]
  %s1 = inlined_call_operand.vmem [shape: f32[8,16], index: 1, kind: input, shape index: {}]
  %s2 = inlined_call_operand.vmem [shape: f32[8,1], index: 2, kind: input, shape index: {}]
  %s3 = inlined_call_operand.vmem [shape: f32[8,72], index: 3, kind: input, shape index: {}]
  %s4 = inlined_call_operand.vmem [shape: f32[8,1], index: 4, kind: input, shape index: {}]
  %s5 = inlined_call_operand.vmem [shape: f32[16,8], index: 5, kind: input, shape index: {}]
  %s6 = inlined_call_operand.vmem [shape: f32[16,1], index: 6, kind: input, shape index: {}]
  %s7 = inlined_call_operand.vmem [shape: f32[9,256], index: 7, kind: input, shape index: {}]
  %s8 = inlined_call_operand.hbm [shape: f32[2,16,256], index: 8, kind: output, shape index: {}]
  %s9 = sld [smem:[#allocation0]]
  $region69: #{tpu_custom_call.1} parent=0
    _
  %s11 = ssub.s32 1, %s9
  %s12 = scalar_select 0, %s11, %s9
  $region1: #{tpu_custom_call.1} parent=0
    #allocation3 [shape = 'u8[32768]{0}', space=vmem, size = 0x8000, scoped, tag = 'input window, operand 0']
    #allocation4 [shape = 's32[2]{0}', space=sflag, size = 0x8, scoped, tag = 'scoped memory for tpu_custom_call.1']
    #allocation5 [shape = 's32[2]{0}', space=sflag, size = 0x8, scoped, tag = 'scoped memory for tpu_custom_call.1']
    #allocation6 [shape = 'u8[32768]{0}', space=vmem, size = 0x8000, scoped, tag = 'output window, operand 0']
    %13 = vsyncpa [#allocation4], 0
    %s14 = scalar_lea.sflag [#allocation4], 1
    %15 = vsyncpa %s14, 0
    %16 = vsyncpa [#allocation5], 0
    %s17 = scalar_lea.sflag [#allocation5], 1
    %18 = vsyncpa %s17, 0
    loop: start=0, step=1, limit=4
    $region2: #{tpu_custom_call.1} parent=1 // loop_pre_header
      _
    $region3: #{tpu_custom_call.1} parent=1 // loop_header
      %s20 = sphi 0, %s24
      %p21 = scmp.ge.s32.totalorder %s20, 4
      %s30 = sphi 0, %s32
      %s33 = sphi 0, %s30
      %s34 = sphi 0, %s33
      %s50 = sphi 0, %s34
      %s54 = sphi 0, %s54
      %s56 = sphi 0, %s54
      %s57 = sphi 0, %s56
      %s71 = sphi 0, %s57
      %s75 = sphi 0, %s75
      %s77 = sphi 0, %s75
      %s78 = sphi 0, %s77
      %s92 = sphi 0, %s78
      %s96 = sphi 0, %s96
      %s98 = sphi 0, %s96
      %s99 = sphi 0, %s98
      %s113 = sphi 0, %s99
      %s117 = sphi 0, %s117
      %s119 = sphi 0, %s117
      %s120 = sphi 0, %s119
      %s134 = sphi 0, %s120
      %s138 = sphi 0, %s138
      %s140 = sphi 0, %s138
      %s141 = sphi 0, %s140
      %s155 = sphi 0, %s141
      %s159 = sphi 0, %s159
      %s161 = sphi 0, %s159
      %s162 = sphi 0, %s161
      %s176 = sphi 0, %s162
      %s180 = sphi 0, %s180
      %s182 = sphi 0, %s180
      %s183 = sphi 0, %s182
      %s197 = sphi 0, %s183
      %s203 = sphi 0, %s205
      %s206 = sphi 0, %s203
      %s207 = sphi 0, %s206
      %s223 = sphi 0, %s207
    $region4: #{tpu_custom_call.1} parent=1 // loop_header_branch
      %23 = sbr.rel (%p21) target = $region8
    $region5: #{tpu_custom_call.1} parent=1 // loop_body
      %s25 = ssub.s32 %s20, 1
      %s26 = ssub.s32 %s20, 2
      %s27 = sadd.s32 %s20, 1
      %s28 = ssub.s32 %s20, %s27
      %p29 = scmp.eq.s32.totalorder %s28, 0
      %s31 = sadd.s32 %s30, 1
      %s32 = scalar_select %p29, %s30, %s31
      %p35 = pneg %p29
      %p36 = scmp.eq.s32.totalorder %s20, 1
      %p37 = por %p35, %p36
      %p38 = scmp.ne.s32.totalorder %s30, %s33
      %p39 = scmp.eq.s32.totalorder %s20, 0
      %p40 = por %p38, %p39
      %p41 = scmp.ne.s32.totalorder %s30, %s33
      %p42 = scmp.eq.s32.totalorder %s25, 1
      %p43 = por %p41, %p42
      %p44 = scmp.ne.s32.totalorder %s33, %s34
      %p45 = scmp.eq.s32.totalorder %s25, 0
      %p46 = por %p44, %p45
      %p47 = scmp.ne.s32.totalorder %s33, %s34
      %p48 = scmp.eq.s32.totalorder %s26, 1
      %p49 = por %p47, %p48
      %p51 = scmp.ne.s32.totalorder %s34, %s50
      %p52 = scmp.eq.s32.totalorder %s26, 0
      %p53 = por %p51, %p52
      %s55 = sadd.s32 %s54, 1
      %p58 = scmp.eq.s32.totalorder %s20, 1
      %p59 = scmp.ne.s32.totalorder %s54, %s56
      %p60 = scmp.eq.s32.totalorder %s20, 0
      %p61 = por %p59, %p60
      %p62 = scmp.ne.s32.totalorder %s54, %s56
      %p63 = scmp.eq.s32.totalorder %s25, 1
      %p64 = por %p62, %p63
      %p65 = scmp.ne.s32.totalorder %s56, %s57
      %p66 = scmp.eq.s32.totalorder %s25, 0
      %p67 = por %p65, %p66
      %p68 = scmp.ne.s32.totalorder %s56, %s57
      %p69 = scmp.eq.s32.totalorder %s26, 1
      %p70 = por %p68, %p69
      %p72 = scmp.ne.s32.totalorder %s57, %s71
      %p73 = scmp.eq.s32.totalorder %s26, 0
      %p74 = por %p72, %p73
      %s76 = sadd.s32 %s75, 1
      %p79 = scmp.eq.s32.totalorder %s20, 1
      %p80 = scmp.ne.s32.totalorder %s75, %s77
      %p81 = scmp.eq.s32.totalorder %s20, 0
      %p82 = por %p80, %p81
      %p83 = scmp.ne.s32.totalorder %s75, %s77
      %p84 = scmp.eq.s32.totalorder %s25, 1
      %p85 = por %p83, %p84
      %p86 = scmp.ne.s32.totalorder %s77, %s78
      %p87 = scmp.eq.s32.totalorder %s25, 0
      %p88 = por %p86, %p87
      %p89 = scmp.ne.s32.totalorder %s77, %s78
      %p90 = scmp.eq.s32.totalorder %s26, 1
      %p91 = por %p89, %p90
      %p93 = scmp.ne.s32.totalorder %s78, %s92
      %p94 = scmp.eq.s32.totalorder %s26, 0
      %p95 = por %p93, %p94
      %s97 = sadd.s32 %s96, 1
      %p100 = scmp.eq.s32.totalorder %s20, 1
      %p101 = scmp.ne.s32.totalorder %s96, %s98
      %p102 = scmp.eq.s32.totalorder %s20, 0
      %p103 = por %p101, %p102
      %p104 = scmp.ne.s32.totalorder %s96, %s98
      %p105 = scmp.eq.s32.totalorder %s25, 1
      %p106 = por %p104, %p105
      %p107 = scmp.ne.s32.totalorder %s98, %s99
      %p108 = scmp.eq.s32.totalorder %s25, 0
      %p109 = por %p107, %p108
      %p110 = scmp.ne.s32.totalorder %s98, %s99
      %p111 = scmp.eq.s32.totalorder %s26, 1
      %p112 = por %p110, %p111
      %p114 = scmp.ne.s32.totalorder %s99, %s113
      %p115 = scmp.eq.s32.totalorder %s26, 0
      %p116 = por %p114, %p115
      %s118 = sadd.s32 %s117, 1
      %p121 = scmp.eq.s32.totalorder %s20, 1
      %p122 = scmp.ne.s32.totalorder %s117, %s119
      %p123 = scmp.eq.s32.totalorder %s20, 0
      %p124 = por %p122, %p123
      %p125 = scmp.ne.s32.totalorder %s117, %s119
      %p126 = scmp.eq.s32.totalorder %s25, 1
      %p127 = por %p125, %p126
      %p128 = scmp.ne.s32.totalorder %s119, %s120
      %p129 = scmp.eq.s32.totalorder %s25, 0
      %p130 = por %p128, %p129
      %p131 = scmp.ne.s32.totalorder %s119, %s120
      %p132 = scmp.eq.s32.totalorder %s26, 1
      %p133 = por %p131, %p132
      %p135 = scmp.ne.s32.totalorder %s120, %s134
      %p136 = scmp.eq.s32.totalorder %s26, 0
      %p137 = por %p135, %p136
      %s139 = sadd.s32 %s138, 1
      %p142 = scmp.eq.s32.totalorder %s20, 1
      %p143 = scmp.ne.s32.totalorder %s138, %s140
      %p144 = scmp.eq.s32.totalorder %s20, 0
      %p145 = por %p143, %p144
      %p146 = scmp.ne.s32.totalorder %s138, %s140
      %p147 = scmp.eq.s32.totalorder %s25, 1
      %p148 = por %p146, %p147
      %p149 = scmp.ne.s32.totalorder %s140, %s141
      %p150 = scmp.eq.s32.totalorder %s25, 0
      %p151 = por %p149, %p150
      %p152 = scmp.ne.s32.totalorder %s140, %s141
      %p153 = scmp.eq.s32.totalorder %s26, 1
      %p154 = por %p152, %p153
      %p156 = scmp.ne.s32.totalorder %s141, %s155
      %p157 = scmp.eq.s32.totalorder %s26, 0
      %p158 = por %p156, %p157
      %s160 = sadd.s32 %s159, 1
      %p163 = scmp.eq.s32.totalorder %s20, 1
      %p164 = scmp.ne.s32.totalorder %s159, %s161
      %p165 = scmp.eq.s32.totalorder %s20, 0
      %p166 = por %p164, %p165
      %p167 = scmp.ne.s32.totalorder %s159, %s161
      %p168 = scmp.eq.s32.totalorder %s25, 1
      %p169 = por %p167, %p168
      %p170 = scmp.ne.s32.totalorder %s161, %s162
      %p171 = scmp.eq.s32.totalorder %s25, 0
      %p172 = por %p170, %p171
      %p173 = scmp.ne.s32.totalorder %s161, %s162
      %p174 = scmp.eq.s32.totalorder %s26, 1
      %p175 = por %p173, %p174
      %p177 = scmp.ne.s32.totalorder %s162, %s176
      %p178 = scmp.eq.s32.totalorder %s26, 0
      %p179 = por %p177, %p178
      %s181 = sadd.s32 %s180, 1
      %p184 = scmp.eq.s32.totalorder %s20, 1
      %p185 = scmp.ne.s32.totalorder %s180, %s182
      %p186 = scmp.eq.s32.totalorder %s20, 0
      %p187 = por %p185, %p186
      %p188 = scmp.ne.s32.totalorder %s180, %s182
      %p189 = scmp.eq.s32.totalorder %s25, 1
      %p190 = por %p188, %p189
      %p191 = scmp.ne.s32.totalorder %s182, %s183
      %p192 = scmp.eq.s32.totalorder %s25, 0
      %p193 = por %p191, %p192
      %p194 = scmp.ne.s32.totalorder %s182, %s183
      %p195 = scmp.eq.s32.totalorder %s26, 1
      %p196 = por %p194, %p195
      %p198 = scmp.ne.s32.totalorder %s183, %s197
      %p199 = scmp.eq.s32.totalorder %s26, 0
      %p200 = por %p198, %p199
      %s201 = ssub.s32 %s20, %s27
      %p202 = scmp.eq.s32.totalorder %s201, 0
      %s204 = sadd.s32 %s203, 1
      %s205 = scalar_select %p202, %s203, %s204
      %p208 = pneg %p202
      %p209 = scmp.eq.s32.totalorder %s20, 1
      %p210 = por %p208, %p209
      %p211 = scmp.ne.s32.totalorder %s203, %s206
      %p212 = scmp.eq.s32.totalorder %s20, 0
      %p213 = por %p211, %p212
      %p214 = scmp.ne.s32.totalorder %s203, %s206
      %p215 = scmp.eq.s32.totalorder %s25, 1
      %p216 = por %p214, %p215
      %p217 = scmp.ne.s32.totalorder %s206, %s207
      %p218 = scmp.eq.s32.totalorder %s25, 0
      %p219 = por %p217, %p218
      %p220 = scmp.ne.s32.totalorder %s206, %s207
      %p221 = scmp.eq.s32.totalorder %s26, 1
      %p222 = por %p220, %p221
      %p224 = scmp.ne.s32.totalorder %s207, %s223
      %p225 = scmp.eq.s32.totalorder %s26, 0
      %p226 = por %p224, %p225
      %p227 = scmp.le.s32.totalorder 1, %s20
      %p228 = scmp.lt.s32.totalorder %s20, 3
      %p229 = pnand %p227, %p228
      %p230 = pneg %p229
      // Predicated region
      $region9: #{tpu_custom_call.1} parent=5 // pred_check
        _
      $region10: #{tpu_custom_call.1} parent=5 // pred_check_branch
        %232 = sbr.rel (%p229) target = $region12
      $region11: #{tpu_custom_call.1} parent=5 // pred_region
        %s233 = ssub.s32 %s20, 1
        // Predicated region
        $region13: #{tpu_custom_call.1} parent=11 // pred_check
          %p234 = pneg %p67
        $region14: #{tpu_custom_call.1} parent=11 // pred_check_branch
          %236 = sbr.rel (%p234) target = $region16
        $region15: #{tpu_custom_call.1} parent=11 // pred_region
          _
        $region16: #{tpu_custom_call.1} parent=11 // pred_fallthru
          _
        // Predicated region
        $region17: #{tpu_custom_call.1} parent=11 // pred_check
          %p237 = pneg %p88
        $region18: #{tpu_custom_call.1} parent=11 // pred_check_branch
          %239 = sbr.rel (%p237) target = $region20
        $region19: #{tpu_custom_call.1} parent=11 // pred_region
          _
        $region20: #{tpu_custom_call.1} parent=11 // pred_fallthru
          _
        // Predicated region
        $region21: #{tpu_custom_call.1} parent=11 // pred_check
          %p240 = pneg %p109
        $region22: #{tpu_custom_call.1} parent=11 // pred_check_branch
          %242 = sbr.rel (%p240) target = $region24
        $region23: #{tpu_custom_call.1} parent=11 // pred_region
          _
        $region24: #{tpu_custom_call.1} parent=11 // pred_fallthru
          _
        // Predicated region
        $region25: #{tpu_custom_call.1} parent=11 // pred_check
          %p243 = pneg %p130
        $region26: #{tpu_custom_call.1} parent=11 // pred_check_branch
          %245 = sbr.rel (%p243) target = $region28
        $region27: #{tpu_custom_call.1} parent=11 // pred_region
          _
        $region28: #{tpu_custom_call.1} parent=11 // pred_fallthru
          _
        // Predicated region
        $region29: #{tpu_custom_call.1} parent=11 // pred_check
          %p246 = pneg %p151
        $region30: #{tpu_custom_call.1} parent=11 // pred_check_branch
          %248 = sbr.rel (%p246) target = $region32
        $region31: #{tpu_custom_call.1} parent=11 // pred_region
          _
        $region32: #{tpu_custom_call.1} parent=11 // pred_fallthru
          _
        // Predicated region
        $region33: #{tpu_custom_call.1} parent=11 // pred_check
          %p249 = pneg %p172
        $region34: #{tpu_custom_call.1} parent=11 // pred_check_branch
          %251 = sbr.rel (%p249) target = $region36
        $region35: #{tpu_custom_call.1} parent=11 // pred_region
          _
        $region36: #{tpu_custom_call.1} parent=11 // pred_fallthru
          _
        // Predicated region
        $region37: #{tpu_custom_call.1} parent=11 // pred_check
          %p252 = pneg %p193
        $region38: #{tpu_custom_call.1} parent=11 // pred_check_branch
          %254 = sbr.rel (%p252) target = $region40
        $region39: #{tpu_custom_call.1} parent=11 // pred_region
          _
        $region40: #{tpu_custom_call.1} parent=11 // pred_fallthru
          _
      $region12: #{tpu_custom_call.1} parent=5 // pred_fallthru
        _
      %p255 = scmp.lt.s32.totalorder %s20, 2
      // Predicated region
      $region41: #{tpu_custom_call.1} parent=5 // pred_check
        %p256 = pneg %p255
      $region42: #{tpu_custom_call.1} parent=5 // pred_check_branch
        %258 = sbr.rel (%p256) target = $region44
      $region43: #{tpu_custom_call.1} parent=5 // pred_region
        // Predicated region
        $region45: #{tpu_custom_call.1} parent=43 // pred_check
          %p259 = pneg %p40
        $region46: #{tpu_custom_call.1} parent=43 // pred_check_branch
          %261 = sbr.rel (%p259) target = $region48
        $region47: #{tpu_custom_call.1} parent=43 // pred_region
          %s262 = sand.u32 %s30, 1
          %s263 = scalar_lea.sflag [#allocation4], %s262
          %s264 = sand.u32 %s30, 1
          %s265 = smul.addr %s264, 32
          %s266 = scalar_lea.vmem [#allocation3], %s265
          %s268 = ssub.s32 512, 512
          %269 = vsyncadd %s263, %s268
          %s270 = smul.addr %s20, 4
          %s271 = smul.addr %s270, 128
          %s272 = scalar_lea.hbm %s0, %s271
          %s273 = sshll.u32 %s266, 4
          %s274 = int_to_ptr.vmem [resolvable:$true] %s273
          %279 = dma.hbm_to_vmem [thread:$0]  %s272, 512, %s274, %s263, 256, 256, 16
        $region48: #{tpu_custom_call.1} parent=43 // pred_fallthru
          _
      $region44: #{tpu_custom_call.1} parent=5 // pred_fallthru
        _
      %p280 = scmp.le.s32.totalorder 1, %s20
      %p281 = scmp.lt.s32.totalorder %s20, 3
      %p282 = pnand %p280, %p281
      %p283 = pneg %p282
      // Predicated region
      $region49: #{tpu_custom_call.1} parent=5 // pred_check
        _
      $region50: #{tpu_custom_call.1} parent=5 // pred_check_branch
        %285 = sbr.rel (%p282) target = $region52
      $region51: #{tpu_custom_call.1} parent=5 // pred_region
        %s286 = ssub.s32 %s20, 1
        %s287 = sand.u32 %s33, 1
        %s288 = scalar_lea.sflag [#allocation4], %s287
        %s289 = sand.u32 %s33, 1
        %s290 = smul.addr %s289, 32
        %s291 = scalar_lea.vmem [#allocation3], %s290
        // Predicated region
        $region53: #{tpu_custom_call.1} parent=51 // pred_check
          %p292 = pneg %p46
        $region54: #{tpu_custom_call.1} parent=51 // pred_check_branch
          %294 = sbr.rel (%p292) target = $region56
        $region55: #{tpu_custom_call.1} parent=51 // pred_region
          %295 = dma.done %s288, 512
        $region56: #{tpu_custom_call.1} parent=51 // pred_fallthru
          _
        %s296 = sand.u32 %s33, 1
        %s297 = scalar_lea.sflag [#allocation4], %s296
        %s298 = sand.u32 %s33, 1
        %s299 = smul.addr %s298, 32
        %s300 = scalar_lea.vmem [#allocation3], %s299
        %p301 = pneg %p46
        %p302 = pneg %p43
        %p303 = pneg %p67
        %p304 = pneg %p64
        %p305 = pneg %p88
        %p306 = pneg %p85
        %p307 = pneg %p109
        %p308 = pneg %p106
        %p309 = pneg %p130
        %p310 = pneg %p127
        %p311 = pneg %p151
        %p312 = pneg %p148
        %p313 = pneg %p172
        %p314 = pneg %p169
        %p315 = pneg %p193
        %p316 = pneg %p190
        %p317 = pneg %p219
        %p318 = pneg %p216
        %s319 = sand.u32 %s206, 1
        %s320 = scalar_lea.sflag [#allocation5], %s319
        %s321 = sand.u32 %s206, 1
        %s322 = smul.addr %s321, 32
        %s323 = scalar_lea.vmem [#allocation6], %s322
        %v324 = vld [vmem:[%s291] sm:$0xff]
        %v325 = vld [vmem:[%s291 + $0x8] sm:$0xff]
        %v326 = vld [vmem:[%s291 + $0x10] sm:$0xff]
        %v327 = vld [vmem:[%s291 + $0x18] sm:$0xff]
        %v328 = vld [vmem:[%s1] sm:$0xff]
        %v329 = vld [vmem:[%s2] sm:$0xff]
        %331 = vset.pattern.permute.xlu0 0
        %332 = vperm.xlu0 %331, %v329
        %v333 = vpop.permute.xlu0 %332
        %vm335 = vcmask 130048
        %v337 = vsel %vm335, %v328, 0
        %339 = vmatprep.subr.mxu0 %v325
        %340 = vmatpush1.msra.mxu0 %v324
        %341 = vmatprep.subr.mxu0 %v327
        %342 = vmatpush1.msra.mxu0 %v326
        %343 = vmatprep.subr.mxu0 0.0
        %344 = vmatpush1.msra.mxu0 0.0
        %345 = vmatprep.subr.mxu0 0.0
        %346 = vmatpush1.msra.mxu0 0.0
        %347 = vmatprep.subr.mxu0 0.0
        %348 = vmatpush1.msra.mxu0 0.0
        %349 = vmatprep.subr.mxu0 0.0
        %350 = vmatpush1.msra.mxu0 0.0
        %351 = vmatprep.subr.mxu0 0.0
        %352 = vmatpush1.msra.mxu0 0.0
        %353 = vmatprep.subr.mxu0 0.0
        %354 = vmatpush1.msra.mxu0 0.0
        %355 = vmatprep.subr.mxu0 0.0
        %356 = vmatpush1.msra.mxu0 0.0
        %357 = vmatprep.subr.mxu0 0.0
        %358 = vmatpush1.msra.mxu0 0.0
        %359 = vmatprep.subr.mxu0 0.0
        %360 = vmatpush1.msra.mxu0 0.0
        %361 = vmatprep.subr.mxu0 0.0
        %362 = vmatpush1.msra.mxu0 0.0
        %363 = vmatprep.subr.mxu0 0.0
        %364 = vmatpush1.msra.mxu0 0.0
        %365 = vmatprep.subr.mxu0 0.0
        %366 = vmatpush1.msra.mxu0 0.0
        %367 = vmatprep.subr.mxu0 0.0
        %368 = vmatpush1.msra.mxu0 0.0
        %369 = vmatprep.subr.mxu0 0.0
        %370 = vmatpush1.msra.mxu0 0.0
        %371 = vmatprep.subr.mxu0 0.0
        %372 = vmatpush1.msra.mxu0 0.0
        %373 = vmatprep.subr.mxu0 0.0
        %374 = vmatpush1.msra.mxu0 0.0
        %375 = vmatprep.subr.mxu0 0.0
        %376 = vmatpush1.msra.mxu0 0.0
        %377 = vmatprep.subr.mxu0 0.0
        %378 = vmatpush1.msra.mxu0 0.0
        %379 = vmatprep.subr.mxu0 0.0
        %380 = vmatpush1.msra.mxu0 0.0
        %381 = vmatprep.subr.mxu0 0.0
        %382 = vmatpush1.msra.mxu0 0.0
        %383 = vmatprep.subr.mxu0 0.0
        %384 = vmatpush1.msra.mxu0 0.0
        %385 = vmatprep.subr.mxu0 0.0
        %386 = vmatpush1.msra.mxu0 0.0
        %387 = vmatprep.subr.mxu0 0.0
        %388 = vmatpush1.msra.mxu0 0.0
        %389 = vmatprep.subr.mxu0 0.0
        %390 = vmatpush1.msra.mxu0 0.0
        %391 = vmatprep.subr.mxu0 0.0
        %392 = vmatpush1.msra.mxu0 0.0
        %393 = vmatprep.subr.mxu0 0.0
        %394 = vmatpush1.msra.mxu0 0.0
        %395 = vmatprep.subr.mxu0 0.0
        %396 = vmatpush1.msra.mxu0 0.0
        %397 = vmatprep.subr.mxu0 0.0
        %398 = vmatpush1.msra.mxu0 0.0
        %399 = vmatprep.subr.mxu0 0.0
        %400 = vmatpush1.msra.mxu0 0.0
        %401 = vmatprep.subr.mxu0 0.0
        %402 = vmatpush1.msra.mxu0 0.0
        %403 = vmatprep.mubr.f32.mxu0 0.0
        %404 = vmatmul.mubr.f32.gmra.mrb[0].mxu0 %v337
        %v405 = vpop.f32.mrb[0].mxu0
        %v406 = vadd.f32 %v333, %v405
        %v407 = vpop.f32.mrb[0].mxu0
        %v408 = vadd.f32 %v333, %v407
        %409 = vdwg.mxu0
        %v410 = vmax.f32 %v406, 0.0
        %v411 = vmax.f32 %v408, 0.0
        %412 = vrot.lane.b32.xlu0 %v410, 17
        %v413 = vpop.permute.xlu0 %412
        %414 = vrot.lane.b32.xlu0 %v411, 17
        %v415 = vpop.permute.xlu0 %414
        %v416 = vlaneseq
        %v417 = vand.u32 %v416, 127
        %vm418 = vcmp.lt.s32.totalorder %v417, 17
        %v419 = vsel %vm418, %v413, %v415
        %v420 = vsel %vm418, %v415, %v413
        %v421 = vld [vmem:[%s7] ss:$8 sm:$0x3]
        %v423 = vlaneseq
        %v424 = vshrl.u32 %v423, 7
        %v425 = vsub.s32 0, %v424
        %v426 = vrot.slane %v421, %v425
        %v427 = vlaneseq
        %v428 = vshrl.u32 %v427, 7
        %v429 = vsub.s32 1, %v428
        %v430 = vrot.slane %v421, %v429
        %v433 = vmul.f32 %v420, %v426
        %v434 = vmul.f32 %v419, %v430
        %435 = vst [vmem:[#allocation2] sm:$0xff] %v433
        %436 = vst [vmem:[#allocation2 + $0x8] sm:$0xff] %v434
        %437 = vrot.lane.b32.xlu0 %v410, 16
        %v438 = vpop.permute.xlu0 %437
        %439 = vrot.lane.b32.xlu0 %v411, 16
        %v440 = vpop.permute.xlu0 %439
        %vm441 = vcmp.lt.s32.totalorder %v417, 16
        %v442 = vsel %vm441, %v438, %v440
        %v443 = vsel %vm441, %v440, %v438
        %s444 = scalar_lea.vmem %s7, 1
        %v445 = vld [vmem:[%s444] ss:$8 sm:$0x3]
        %v447 = vlaneseq
        %v448 = vshrl.u32 %v447, 7
        %v449 = vsub.s32 0, %v448
        %v450 = vrot.slane %v445, %v449
        %v451 = vlaneseq
        %v452 = vshrl.u32 %v451, 7
        %v453 = vsub.s32 1, %v452
        %v454 = vrot.slane %v445, %v453
        %v457 = vmul.f32 %v443, %v450
        %v458 = vmul.f32 %v442, %v454
        %459 = vst [vmem:[#allocation2 + $0x10] sm:$0xff] %v457
        %460 = vst [vmem:[#allocation2 + $0x18] sm:$0xff] %v458
        %461 = vrot.lane.b32.xlu0 %v410, 15
        %v462 = vpop.permute.xlu0 %461
        %463 = vrot.lane.b32.xlu0 %v411, 15
        %v464 = vpop.permute.xlu0 %463
        %vm465 = vcmp.lt.s32.totalorder %v417, 15
        %v466 = vsel %vm465, %v462, %v464
        %v467 = vsel %vm465, %v464, %v462
        %s468 = scalar_lea.vmem %s7, 2
        %v469 = vld [vmem:[%s468] ss:$8 sm:$0x3]
        %v471 = vlaneseq
        %v472 = vshrl.u32 %v471, 7
        %v473 = vsub.s32 0, %v472
        %v474 = vrot.slane %v469, %v473
        %v475 = vlaneseq
        %v476 = vshrl.u32 %v475, 7
        %v477 = vsub.s32 1, %v476
        %v478 = vrot.slane %v469, %v477
        %v481 = vmul.f32 %v467, %v474
        %v482 = vmul.f32 %v466, %v478
        %483 = vst [vmem:[#allocation2 + $0x20] sm:$0xff] %v481
        %484 = vst [vmem:[#allocation2 + $0x28] sm:$0xff] %v482
        %485 = vrot.lane.b32.xlu0 %v410, 1
        %v486 = vpop.permute.xlu0 %485
        %487 = vrot.lane.b32.xlu0 %v411, 1
        %v488 = vpop.permute.xlu0 %487
        %vm489 = vcmp.lt.s32.totalorder %v417, 1
        %v490 = vsel %vm489, %v486, %v488
        %v491 = vsel %vm489, %v488, %v486
        %s492 = scalar_lea.vmem %s7, 3
        %v493 = vld [vmem:[%s492] ss:$8 sm:$0x3]
        %v495 = vlaneseq
        %v496 = vshrl.u32 %v495, 7
        %v497 = vsub.s32 0, %v496
        %v498 = vrot.slane %v493, %v497
        %v499 = vlaneseq
        %v500 = vshrl.u32 %v499, 7
        %v501 = vsub.s32 1, %v500
        %v502 = vrot.slane %v493, %v501
        %v505 = vmul.f32 %v491, %v498
        %v506 = vmul.f32 %v490, %v502
        %507 = vst [vmem:[#allocation2 + $0x30] sm:$0xff] %v505
        %508 = vst [vmem:[#allocation2 + $0x38] sm:$0xff] %v506
        %509 = vst [vmem:[#allocation2 + $0x40] sm:$0xff] %v410
        %510 = vst [vmem:[#allocation2 + $0x48] sm:$0xff] %v411
        %511 = vrot.lane.b32.xlu0 %v410, 127
        %v512 = vpop.permute.xlu0 %511
        %513 = vrot.lane.b32.xlu0 %v411, 127
        %v514 = vpop.permute.xlu0 %513
        %vm515 = vcmp.lt.s32.totalorder %v417, 127
        %v516 = vsel %vm515, %v512, %v514
        %v517 = vsel %vm515, %v514, %v512
        %s518 = scalar_lea.vmem %s7, 5
        %v519 = vld [vmem:[%s518] ss:$8 sm:$0x3]
        %v521 = vlaneseq
        %v522 = vshrl.u32 %v521, 7
        %v523 = vsub.s32 0, %v522
        %v524 = vrot.slane %v519, %v523
        %v525 = vlaneseq
        %v526 = vshrl.u32 %v525, 7
        %v527 = vsub.s32 1, %v526
        %v528 = vrot.slane %v519, %v527
        %v531 = vmul.f32 %v516, %v524
        %v532 = vmul.f32 %v517, %v528
        %533 = vst [vmem:[#allocation2 + $0x50] sm:$0xff] %v531
        %534 = vst [vmem:[#allocation2 + $0x58] sm:$0xff] %v532
        %535 = vrot.lane.b32.xlu0 %v410, 113
        %v536 = vpop.permute.xlu0 %535
        %537 = vrot.lane.b32.xlu0 %v411, 113
        %v538 = vpop.permute.xlu0 %537
        %vm539 = vcmp.lt.s32.totalorder %v417, 113
        %v540 = vsel %vm539, %v536, %v538
        %v541 = vsel %vm539, %v538, %v536
        %s542 = scalar_lea.vmem %s7, 6
        %v543 = vld [vmem:[%s542] ss:$8 sm:$0x3]
        %v545 = vlaneseq
        %v546 = vshrl.u32 %v545, 7
        %v547 = vsub.s32 0, %v546
        %v548 = vrot.slane %v543, %v547
        %v549 = vlaneseq
        %v550 = vshrl.u32 %v549, 7
        %v551 = vsub.s32 1, %v550
        %v552 = vrot.slane %v543, %v551
        %v555 = vmul.f32 %v540, %v548
        %v556 = vmul.f32 %v541, %v552
        %557 = vst [vmem:[#allocation2 + $0x60] sm:$0xff] %v555
        %558 = vst [vmem:[#allocation2 + $0x68] sm:$0xff] %v556
        %559 = vrot.lane.b32.xlu0 %v410, 112
        %v560 = vpop.permute.xlu0 %559
        %561 = vrot.lane.b32.xlu0 %v411, 112
        %v562 = vpop.permute.xlu0 %561
        %vm563 = vcmp.lt.s32.totalorder %v417, 112
        %v564 = vsel %vm563, %v560, %v562
        %v565 = vsel %vm563, %v562, %v560
        %s566 = scalar_lea.vmem %s7, 7
        %v567 = vld [vmem:[%s566] ss:$8 sm:$0x3]
        %v569 = vlaneseq
        %v570 = vshrl.u32 %v569, 7
        %v571 = vsub.s32 0, %v570
        %v572 = vrot.slane %v567, %v571
        %v573 = vlaneseq
        %v574 = vshrl.u32 %v573, 7
        %v575 = vsub.s32 1, %v574
        %v576 = vrot.slane %v567, %v575
        %v579 = vmul.f32 %v564, %v572
        %v580 = vmul.f32 %v565, %v576
        %581 = vst [vmem:[#allocation2 + $0x70] sm:$0xff] %v579
        %582 = vst [vmem:[#allocation2 + $0x78] sm:$0xff] %v580
        %583 = vrot.lane.b32.xlu0 %v410, 111
        %v584 = vpop.permute.xlu0 %583
        %585 = vrot.lane.b32.xlu0 %v411, 111
        %v586 = vpop.permute.xlu0 %585
        %vm587 = vcmp.lt.s32.totalorder %v417, 111
        %v588 = vsel %vm587, %v584, %v586
        %v589 = vsel %vm587, %v586, %v584
        %s590 = scalar_lea.vmem %s7, 16
        %v591 = vld [vmem:[%s590] ss:$8 sm:$0x3]
        %v593 = vlaneseq
        %v594 = vshrl.u32 %v593, 7
        %v595 = vsub.s32 0, %v594
        %v596 = vrot.slane %v591, %v595
        %v597 = vlaneseq
        %v598 = vshrl.u32 %v597, 7
        %v599 = vsub.s32 1, %v598
        %v600 = vrot.slane %v591, %v599
        %v603 = vmul.f32 %v588, %v596
        %v604 = vmul.f32 %v589, %v600
        %605 = vst [vmem:[#allocation2 + $0x80] sm:$0xff] %v603
        %606 = vst [vmem:[#allocation2 + $0x88] sm:$0xff] %v604
        %v607 = vld [vmem:[%s3] sm:$0xff]
        %v608 = vld [vmem:[#allocation2] sm:$0xff]
        %v609 = vld [vmem:[#allocation2 + $0x8] sm:$0xff]
        %v610 = vld [vmem:[#allocation2 + $0x10] sm:$0xff]
        %v611 = vld [vmem:[#allocation2 + $0x18] sm:$0xff]
        %v612 = vld [vmem:[#allocation2 + $0x20] sm:$0xff]
        %v613 = vld [vmem:[#allocation2 + $0x28] sm:$0xff]
        %v614 = vld [vmem:[#allocation2 + $0x30] sm:$0xff]
        %v615 = vld [vmem:[#allocation2 + $0x38] sm:$0xff]
        %v616 = vld [vmem:[#allocation2 + $0x40] sm:$0xff]
        %v617 = vld [vmem:[#allocation2 + $0x48] sm:$0xff]
        %v618 = vld [vmem:[#allocation2 + $0x50] sm:$0xff]
        %v619 = vld [vmem:[#allocation2 + $0x58] sm:$0xff]
        %v620 = vld [vmem:[#allocation2 + $0x60] sm:$0xff]
        %v621 = vld [vmem:[#allocation2 + $0x68] sm:$0xff]
        %v622 = vld [vmem:[#allocation2 + $0x70] sm:$0xff]
        %v623 = vld [vmem:[#allocation2 + $0x78] sm:$0xff]
        %v624 = vld [vmem:[#allocation2 + $0x80] sm:$0xff]
        %v625 = vld [vmem:[#allocation2 + $0x88] sm:$0xff]
        %v626 = vld [vmem:[%s4] sm:$0xff]
        %628 = vset.pattern.permute.xlu0 0
        %629 = vperm.xlu0 %628, %v626
        %v630 = vpop.permute.xlu0 %629
        %vm632 = vcmask 588800
        %v634 = vsel %vm632, %v607, 0
        %636 = vmatprep.subr.mxu0 %v609
        %637 = vmatpush1.msra.mxu0 %v608
        %638 = vmatprep.subr.mxu0 %v611
        %639 = vmatpush1.msra.mxu0 %v610
        %640 = vmatprep.subr.mxu0 %v613
        %641 = vmatpush1.msra.mxu0 %v612
        %642 = vmatprep.subr.mxu0 %v615
        %643 = vmatpush1.msra.mxu0 %v614
        %644 = vmatprep.subr.mxu0 %v617
        %645 = vmatpush1.msra.mxu0 %v616
        %646 = vmatprep.subr.mxu0 %v619
        %647 = vmatpush1.msra.mxu0 %v618
        %648 = vmatprep.subr.mxu0 %v621
        %649 = vmatpush1.msra.mxu0 %v620
        %650 = vmatprep.subr.mxu0 %v623
        %651 = vmatpush1.msra.mxu0 %v622
        %652 = vmatprep.subr.mxu0 %v625
        %653 = vmatpush1.msra.mxu0 %v624
        %654 = vmatprep.subr.mxu0 0.0
        %655 = vmatpush1.msra.mxu0 0.0
        %656 = vmatprep.subr.mxu0 0.0
        %657 = vmatpush1.msra.mxu0 0.0
        %658 = vmatprep.subr.mxu0 0.0
        %659 = vmatpush1.msra.mxu0 0.0
        %660 = vmatprep.subr.mxu0 0.0
        %661 = vmatpush1.msra.mxu0 0.0
        %662 = vmatprep.subr.mxu0 0.0
        %663 = vmatpush1.msra.mxu0 0.0
        %664 = vmatprep.subr.mxu0 0.0
        %665 = vmatpush1.msra.mxu0 0.0
        %666 = vmatprep.subr.mxu0 0.0
        %667 = vmatpush1.msra.mxu0 0.0
        %668 = vmatprep.subr.mxu0 0.0
        %669 = vmatpush1.msra.mxu0 0.0
        %670 = vmatprep.subr.mxu0 0.0
        %671 = vmatpush1.msra.mxu0 0.0
        %672 = vmatprep.subr.mxu0 0.0
        %673 = vmatpush1.msra.mxu0 0.0
        %674 = vmatprep.subr.mxu0 0.0
        %675 = vmatpush1.msra.mxu0 0.0
        %676 = vmatprep.subr.mxu0 0.0
        %677 = vmatpush1.msra.mxu0 0.0
        %678 = vmatprep.subr.mxu0 0.0
        %679 = vmatpush1.msra.mxu0 0.0
        %680 = vmatprep.subr.mxu0 0.0
        %681 = vmatpush1.msra.mxu0 0.0
        %682 = vmatprep.subr.mxu0 0.0
        %683 = vmatpush1.msra.mxu0 0.0
        %684 = vmatprep.subr.mxu0 0.0
        %685 = vmatpush1.msra.mxu0 0.0
        %686 = vmatprep.subr.mxu0 0.0
        %687 = vmatpush1.msra.mxu0 0.0
        %688 = vmatprep.subr.mxu0 0.0
        %689 = vmatpush1.msra.mxu0 0.0
        %690 = vmatprep.subr.mxu0 0.0
        %691 = vmatpush1.msra.mxu0 0.0
        %692 = vmatprep.subr.mxu0 0.0
        %693 = vmatpush1.msra.mxu0 0.0
        %694 = vmatprep.subr.mxu0 0.0
        %695 = vmatpush1.msra.mxu0 0.0
        %696 = vmatprep.subr.mxu0 0.0
        %697 = vmatpush1.msra.mxu0 0.0
        %698 = vmatprep.subr.mxu0 0.0
        %699 = vmatpush1.msra.mxu0 0.0
        %700 = vmatprep.mubr.f32.mxu0 0.0
        %701 = vmatmul.mubr.f32.gmra.mrb[0].mxu0 %v634
        %v702 = vpop.f32.mrb[0].mxu0
        %v703 = vadd.f32 %v630, %v702
        %v704 = vpop.f32.mrb[0].mxu0
        %v705 = vadd.f32 %v630, %v704
        %706 = vdwg.mxu0
        %v707 = vmax.f32 %v703, 0.0
        %v708 = vmax.f32 %v705, 0.0
        %v709 = vld [vmem:[%s5] sm:$0xff]
        %v710 = vld [vmem:[%s5 + $0x8] sm:$0xff]
        %v711 = vld [vmem:[%s6] sm:$0xff]
        %v712 = vld [vmem:[%s6 + $0x8] sm:$0xff]
        %714 = vset.pattern.permute.xlu0 0
        %715 = vperm.xlu0 %714, %v711
        %v716 = vpop.permute.xlu0 %715
        %719 = vset.pattern.permute.xlu0 0
        %720 = vperm.xlu0 %719, %v712
        %v721 = vpop.permute.xlu0 %720
        %vm723 = vcmask 64512
        %v725 = vsel %vm723, %v709, 0
        %v728 = vsel %vm723, %v710, 0
        %730 = vmatprep.subr.mxu0 %v708
        %731 = vmatpush1.msra.mxu0 %v707
        %732 = vmatprep.subr.mxu0 0.0
        %733 = vmatpush1.msra.mxu0 0.0
        %734 = vmatprep.subr.mxu0 0.0
        %735 = vmatpush1.msra.mxu0 0.0
        %736 = vmatprep.subr.mxu0 0.0
        %737 = vmatpush1.msra.mxu0 0.0
        %738 = vmatprep.subr.mxu0 0.0
        %739 = vmatpush1.msra.mxu0 0.0
        %740 = vmatprep.subr.mxu0 0.0
        %741 = vmatpush1.msra.mxu0 0.0
        %742 = vmatprep.subr.mxu0 0.0
        %743 = vmatpush1.msra.mxu0 0.0
        %744 = vmatprep.subr.mxu0 0.0
        %745 = vmatpush1.msra.mxu0 0.0
        %746 = vmatprep.subr.mxu0 0.0
        %747 = vmatpush1.msra.mxu0 0.0
        %748 = vmatprep.subr.mxu0 0.0
        %749 = vmatpush1.msra.mxu0 0.0
        %750 = vmatprep.subr.mxu0 0.0
        %751 = vmatpush1.msra.mxu0 0.0
        %752 = vmatprep.subr.mxu0 0.0
        %753 = vmatpush1.msra.mxu0 0.0
        %754 = vmatprep.subr.mxu0 0.0
        %755 = vmatpush1.msra.mxu0 0.0
        %756 = vmatprep.subr.mxu0 0.0
        %757 = vmatpush1.msra.mxu0 0.0
        %758 = vmatprep.subr.mxu0 0.0
        %759 = vmatpush1.msra.mxu0 0.0
        %760 = vmatprep.subr.mxu0 0.0
        %761 = vmatpush1.msra.mxu0 0.0
        %762 = vmatprep.subr.mxu0 0.0
        %763 = vmatpush1.msra.mxu0 0.0
        %764 = vmatprep.subr.mxu0 0.0
        %765 = vmatpush1.msra.mxu0 0.0
        %766 = vmatprep.subr.mxu0 0.0
        %767 = vmatpush1.msra.mxu0 0.0
        %768 = vmatprep.subr.mxu0 0.0
        %769 = vmatpush1.msra.mxu0 0.0
        %770 = vmatprep.subr.mxu0 0.0
        %771 = vmatpush1.msra.mxu0 0.0
        %772 = vmatprep.subr.mxu0 0.0
        %773 = vmatpush1.msra.mxu0 0.0
        %774 = vmatprep.subr.mxu0 0.0
        %775 = vmatpush1.msra.mxu0 0.0
        %776 = vmatprep.subr.mxu0 0.0
        %777 = vmatpush1.msra.mxu0 0.0
        %778 = vmatprep.subr.mxu0 0.0
        %779 = vmatpush1.msra.mxu0 0.0
        %780 = vmatprep.subr.mxu0 0.0
        %781 = vmatpush1.msra.mxu0 0.0
        %782 = vmatprep.subr.mxu0 0.0
        %783 = vmatpush1.msra.mxu0 0.0
        %784 = vmatprep.subr.mxu0 0.0
        %785 = vmatpush1.msra.mxu0 0.0
        %786 = vmatprep.subr.mxu0 0.0
        %787 = vmatpush1.msra.mxu0 0.0
        %788 = vmatprep.subr.mxu0 0.0
        %789 = vmatpush1.msra.mxu0 0.0
        %790 = vmatprep.subr.mxu0 0.0
        %791 = vmatpush1.msra.mxu0 0.0
        %792 = vmatprep.subr.mxu0 0.0
        %793 = vmatpush1.msra.mxu0 0.0
        %794 = vmatprep.mubr.f32.mxu0 0.0
        %795 = vmatmul.mubr.f32.gmra.mrb[0].mxu0 %v725
        %v796 = vpop.f32.mrb[0].mxu0
        %v797 = vadd.f32 %v716, %v796
        %v798 = vpop.f32.mrb[0].mxu0
        %v799 = vadd.f32 %v716, %v798
        %800 = vmatprep.mubr.f32.mxu0 0.0
        %801 = vmatmul.mubr.f32.gmra.mrb[0].mxu0 %v728
        %v802 = vpop.f32.mrb[0].mxu0
        %v803 = vadd.f32 %v721, %v802
        %v804 = vpop.f32.mrb[0].mxu0
        %v805 = vadd.f32 %v721, %v804
        %806 = vdwg.mxu0
        %v807 = vadd.f32 %v797, %v324
        %v808 = vadd.f32 %v799, %v325
        %v809 = vadd.f32 %v803, %v326
        %v810 = vadd.f32 %v805, %v327
        %v811 = vmax.f32 %v807, 0.0
        %v812 = vmax.f32 %v808, 0.0
        %v813 = vmax.f32 %v809, 0.0
        %v814 = vmax.f32 %v810, 0.0
        %815 = vst [vmem:[%s323] sm:$0xff] %v811
        %816 = vst [vmem:[%s323 + $0x8] sm:$0xff] %v812
        %817 = vst [vmem:[%s323 + $0x10] sm:$0xff] %v813
        %818 = vst [vmem:[%s323 + $0x18] sm:$0xff] %v814
        %s819 = sand.u32 %s206, 1
        %s820 = scalar_lea.sflag [#allocation5], %s819
        %s821 = sand.u32 %s206, 1
        %s822 = smul.addr %s821, 32
        %s823 = scalar_lea.vmem [#allocation6], %s822
        // Predicated region
        $region57: #{tpu_custom_call.1} parent=51 // pred_check
          %p824 = pneg %p216
        $region58: #{tpu_custom_call.1} parent=51 // pred_check_branch
          %826 = sbr.rel (%p824) target = $region60
        $region59: #{tpu_custom_call.1} parent=51 // pred_region
          %s828 = ssub.s32 512, 512
          %829 = vsyncadd %s820, %s828
          %s830 = smul.addr %s25, 4
          %s831 = smul.addr %s830, 128
          %s832 = scalar_lea.hbm %s8, %s831
          %s833 = sshll.u32 %s823, 4
          %s834 = int_to_ptr.vmem [resolvable:$true] %s833
          %839 = dma.vmem_to_hbm [thread:$0]  %s834, 512, %s832, %s820, 256, 256, 16
        $region60: #{tpu_custom_call.1} parent=51 // pred_fallthru
          _
      $region52: #{tpu_custom_call.1} parent=5 // pred_fallthru
        _
      %p840 = scmp.le.s32.totalorder 2, %s20
      // Predicated region
      $region61: #{tpu_custom_call.1} parent=5 // pred_check
        %p841 = pneg %p840
      $region62: #{tpu_custom_call.1} parent=5 // pred_check_branch
        %843 = sbr.rel (%p841) target = $region64
      $region63: #{tpu_custom_call.1} parent=5 // pred_region
        %s844 = ssub.s32 %s20, 2
        // Predicated region
        $region65: #{tpu_custom_call.1} parent=63 // pred_check
          %p845 = pneg %p222
        $region66: #{tpu_custom_call.1} parent=63 // pred_check_branch
          %847 = sbr.rel (%p845) target = $region68
        $region67: #{tpu_custom_call.1} parent=63 // pred_region
          %s848 = sand.u32 %s207, 1
          %s849 = scalar_lea.sflag [#allocation5], %s848
          %s850 = sand.u32 %s207, 1
          %s851 = smul.addr %s850, 32
          %s852 = scalar_lea.vmem [#allocation6], %s851
          %853 = dma.done %s849, 512
        $region68: #{tpu_custom_call.1} parent=63 // pred_fallthru
          _
      $region64: #{tpu_custom_call.1} parent=5 // pred_fallthru
        _
    $region6: #{tpu_custom_call.1} parent=1 // loop_footer
      %s24 = sadd.s32 1, %s20
    $region7: #{tpu_custom_call.1} parent=1 // loop_footer_branch
      %19 = sbr.rel target = $region3
    $region8: #{tpu_custom_call.1} parent=1 // loop_exit
      _
    %854 = vsyncpa [#allocation4], 1
    %s855 = scalar_lea.sflag [#allocation4], 1
    %856 = vsyncpa %s855, 1
    %857 = vsyncpa [#allocation5], 1
    %s858 = scalar_lea.sflag [#allocation5], 1
    %859 = vsyncpa %s858, 1

</llo_original>
